<compile_context>
chip_gen: v5e
topology: v5e:2x2
jax: 0.10.0
libtpu: 0.0.40
codegen_flags: <defaults>
</compile_context>

<pallas_src>
import jax
import jax.numpy as jnp
from jax.experimental import pallas as pl
from jax.experimental.pallas import tpu as pltpu

SUBLANE = 8  # second-to-last dim granularity for f32


def _round_up(x, m):
    return ((x + m - 1) // m) * m


def sortnet_kernel(x_ref, w1_ref, w2_ref, b2_ref, o_ref):
    # fc1 (no bias) + tanh: f32 MXU accumulate, tanh on the EUP in f32.
    h = jnp.tanh(
        jnp.dot(x_ref[...], w1_ref[...], preferred_element_type=jnp.float32)
    )
    # fc2 (with bias).
    y = jnp.dot(h.astype(w2_ref.dtype), w2_ref[...],
                preferred_element_type=jnp.float32)
    o_ref[...] = (y + b2_ref[...]).astype(o_ref.dtype)


def sortnet_forward(x, w1_t, w2_t, b2, *, tb_target=8192):
    """Computes tanh(x @ W1^T) @ W2^T + b2.

    x:    [B, I]   (unpadded)
    w1_t: [I, H]   (= fc1.weight.T)
    w2_t: [H, I]   (= fc2.weight.T)
    b2:   [1, I]   (= fc2.bias)

    tb_target: max rows per batch tile.  8192 is sized for v5e/v6e HBM; on
    v7x (3.2 TB/s) prefer 16K-32K so per-tile DMA time still hides the
    per-grid-step overhead.
    """
    B, I = x.shape
    I_, H = w1_t.shape
    assert I == I_ and w2_t.shape == (H, I) and b2.shape == (1, I)

    # Batch tiling:
    #  * at least 2 tiles so the "parallel" axis can shard across both v7x
    #    TensorCores (harmless on single-TC v5e/v6e),
    #  * tiles sized by evenly dividing B (rounded to the 8-row sublane
    #    granularity) so small/odd batches don't get a mostly-padding tile,
    #  * capped at tb_target rows.
    n_tiles = max(2, pl.cdiv(B, tb_target))
    TB = _round_up(pl.cdiv(B, n_tiles), SUBLANE)
    B_pad = _round_up(B, TB)
    x_p = x if B_pad == B else jnp.pad(x, ((0, B_pad - B), (0, 0)))

    grid = (B_pad // TB,)

    # Advisory cost: true (unpadded) work, not padded work.
    cost = pl.CostEstimate(
        flops=2 * 2 * B * I * H,                       # two matmuls
        transcendentals=B * H,                         # tanh
        bytes_accessed=4 * (2 * B * I + 2 * I * H + I),
    )

    out_p = pl.pallas_call(
        sortnet_kernel,
        out_shape=jax.ShapeDtypeStruct((B_pad, I), x.dtype),
        grid_spec=pltpu.PrefetchScalarGridSpec(
            num_scalar_prefetch=0,
            grid=grid,
            in_specs=[
                # x: streamed per batch tile (software-pipelined by Pallas),
                # true feature width (block last dim == full array last dim).
                pl.BlockSpec((TB, I), lambda i: (i, 0)),
                # Weights / bias: constant block index -> DMA'd once, VMEM
                # resident across all batch tiles.
                # TODO(synk): for a scaled-up model (large I*H) add
                # pipeline_mode=pl.Buffered(1) here plus vmem_limit_bytes to
                # stay under v7x's 64 MiB VMEM / 32 MiB scoped default.
                pl.BlockSpec((I, H), lambda i: (0, 0)),
                pl.BlockSpec((H, I), lambda i: (0, 0)),
                pl.BlockSpec((1, I), lambda i: (0, 0)),
            ],
            out_specs=pl.BlockSpec((TB, I), lambda i: (i, 0)),
        ),
        compiler_params=pltpu.CompilerParams(
            dimension_semantics=("parallel",),
        ),
        cost_estimate=cost,
    )(x_p, w1_t, w2_t, b2)

    return out_p if B_pad == B else out_p[:B]


def _reference(x, w1_t, w2_t, b2):
    return jnp.tanh(x @ w1_t) @ w2_t + b2


if __name__ == "__main__":
    input_size = 16
    hidden_size = 32

    key = jax.random.PRNGKey(0)
    kx, kw1, kw2, kb2, kx2 = jax.random.split(key, 5)

    # Deterministic parameter init (PyTorch-style uniform bounds, synthetic).
    bound1 = 1.0 / (input_size ** 0.5)
    bound2 = 1.0 / (hidden_size ** 0.5)
    # fc1.weight: [hidden, input] -> stored transposed as [input, hidden]
    w1_t = jax.random.uniform(kw1, (input_size, hidden_size),
                              minval=-bound1, maxval=bound1, dtype=jnp.float32)
    # fc2.weight: [input, hidden] -> stored transposed as [hidden, input]
    w2_t = jax.random.uniform(kw2, (hidden_size, input_size),
                              minval=-bound2, maxval=bound2, dtype=jnp.float32)
    # fc2.bias: [input]
    b2 = jax.random.uniform(kb2, (1, input_size),
                            minval=-bound2, maxval=bound2, dtype=jnp.float32)

    # Small case matching the module's toy shapes (batch=2).
    batch = 2
    x = jax.random.normal(kx, (batch, input_size), dtype=jnp.float32)
    out = jax.block_until_ready(sortnet_forward(x, w1_t, w2_t, b2))
    ref = _reference(x, w1_t, w2_t, b2)
    assert out.shape == (batch, input_size)
    assert jnp.allclose(out, ref, atol=1e-5, rtol=1e-5)

    # Larger, odd batch exercising the multi-tile grid + balanced tiling +
    # batch padding/slice-off path (300 -> two tiles of 152 rows).
    batch2 = 300
    x2 = jax.random.normal(kx2, (batch2, input_size), dtype=jnp.float32)
    out2 = jax.block_until_ready(sortnet_forward(x2, w1_t, w2_t, b2))
    ref2 = _reference(x2, w1_t, w2_t, b2)
    assert out2.shape == (batch2, input_size)
    assert jnp.allclose(out2, ref2, atol=1e-5, rtol=1e-5)

    print("KERNEL_OK")
</pallas_src>

<mosaic_0001>
module attributes {stable_mosaic.version = 11 : i64} {
  func.func @sortnet_kernel(%arg0: i32, %arg1: memref<8x16xf32, #tpu.memory_space<vmem>>, %arg2: memref<16x32xf32, #tpu.memory_space<vmem>>, %arg3: memref<32x16xf32, #tpu.memory_space<vmem>>, %arg4: memref<1x16xf32, #tpu.memory_space<vmem>>, %arg5: memref<8x16xf32, #tpu.memory_space<vmem>>) attributes {dimension_semantics = [#tpu.dimension_semantics<parallel>], iteration_bounds = array<i64: 1>, scalar_prefetch = 0 : i64, scratch_operands = 0 : i64, tpu.core_type = #tpu.core_type<tc>, window_params = [{transform_indices = @transform_0, window_bounds = array<i64: 8, 16>}, {pipeline_mode = #tpu.pipeline_mode<synchronous>, transform_indices = @transform_1, window_bounds = array<i64: 16, 32>}, {pipeline_mode = #tpu.pipeline_mode<synchronous>, transform_indices = @transform_2, window_bounds = array<i64: 32, 16>}, {pipeline_mode = #tpu.pipeline_mode<synchronous>, transform_indices = @transform_3, window_bounds = array<i64: 1, 16>}, {transform_indices = @transform_4, window_bounds = array<i64: 8, 16>}]} {
    %c0 = arith.constant 0 : index
    %c0_0 = arith.constant 0 : index
    %0 = vector.load %arg1[%c0, %c0_0] : memref<8x16xf32, #tpu.memory_space<vmem>>, vector<8x16xf32>
    %c0_1 = arith.constant 0 : index
    %c0_2 = arith.constant 0 : index
    %1 = vector.load %arg2[%c0_1, %c0_2] : memref<16x32xf32, #tpu.memory_space<vmem>>, vector<16x32xf32>
    %cst = arith.constant dense<0.000000e+00> : vector<8x32xf32>
    %2 = tpu.matmul %0, %1, %cst {dimension_numbers = #tpu.dot_dimension_numbers<[1], [0], [0], [1], [0, 0, 1, 1], [], []>} : vector<8x16xf32>, vector<16x32xf32>, vector<8x32xf32> -> vector<8x32xf32>
    %3 = math.tanh %2 : vector<8x32xf32>
    %c0_3 = arith.constant 0 : index
    %c0_4 = arith.constant 0 : index
    %4 = vector.load %arg3[%c0_3, %c0_4] : memref<32x16xf32, #tpu.memory_space<vmem>>, vector<32x16xf32>
    %cst_5 = arith.constant dense<0.000000e+00> : vector<8x16xf32>
    %5 = tpu.matmul %3, %4, %cst_5 {dimension_numbers = #tpu.dot_dimension_numbers<[1], [0], [0], [1], [0, 0, 1, 1], [], []>} : vector<8x32xf32>, vector<32x16xf32>, vector<8x16xf32> -> vector<8x16xf32>
    %c0_6 = arith.constant 0 : index
    %c0_7 = arith.constant 0 : index
    %6 = vector.load %arg4[%c0_6, %c0_7] : memref<1x16xf32, #tpu.memory_space<vmem>>, vector<1x16xf32>
    %7 = vector.broadcast %6 : vector<1x16xf32> to vector<8x16xf32>
    %8 = arith.addf %5, %7 : vector<8x16xf32>
    %c0_8 = arith.constant 0 : index
    %c0_9 = arith.constant 0 : index
    %9 = vector.load %arg5[%c0_8, %c0_9] : memref<8x16xf32, #tpu.memory_space<vmem>>, vector<8x16xf32>
    tpu.vector_store %arg5[%c0_8, %c0_9], %8 {strides = array<i32>} : memref<8x16xf32, #tpu.memory_space<vmem>>, vector<8x16xf32>,
    return
  }
  func.func @transform_0(%arg0: i32) -> (i32, i32) {
    %c0_i32 = arith.constant 0 : i32
    %c0_i32_0 = arith.constant 0 : i32
    return %arg0, %c0_i32 : i32, i32
  }
  func.func @transform_1(%arg0: i32) -> (i32, i32) {
    %c0_i32 = arith.constant 0 : i32
    %c0_i32_0 = arith.constant 0 : i32
    %c0_i32_1 = arith.constant 0 : i32
    return %c0_i32, %c0_i32_0 : i32, i32
  }
  func.func @transform_2(%arg0: i32) -> (i32, i32) {
    %c0_i32 = arith.constant 0 : i32
    %c0_i32_0 = arith.constant 0 : i32
    %c0_i32_1 = arith.constant 0 : i32
    return %c0_i32, %c0_i32_0 : i32, i32
  }
  func.func @transform_3(%arg0: i32) -> (i32, i32) {
    %c0_i32 = arith.constant 0 : i32
    %c0_i32_0 = arith.constant 0 : i32
    %c0_i32_1 = arith.constant 0 : i32
    return %c0_i32, %c0_i32_0 : i32, i32
  }
  func.func @transform_4(%arg0: i32) -> (i32, i32) {
    %c0_i32 = arith.constant 0 : i32
    %c0_i32_0 = arith.constant 0 : i32
    return %arg0, %c0_i32 : i32, i32
  }
}

</mosaic_0001>

<llo_original>
// kernel: tpu_custom_call.1
$region0: #{tpu_custom_call.1}
  #allocation0 [shape = 'u32[]', space=smem, size = 0x4, offset = 0x4, fixed_abs, tag = 'smem constant byte address 0x4 - core index']
  #allocation1 [shape = 'u32[72,128]{1,0:T(1,128)}', space=vmem, size = 0x9000, scoped, tag = 'internal scratch']
  %s0 = inlined_call_operand.vmem [shape: f32[8,16], index: 0, kind: input, shape index: {}]
  %s1 = inlined_call_operand.vmem [shape: f32[16,32], index: 1, kind: input, shape index: {}]
  %s2 = inlined_call_operand.vmem [shape: f32[32,16], index: 2, kind: input, shape index: {}]
  %s3 = inlined_call_operand.vmem [shape: f32[1,16], index: 3, kind: input, shape index: {}]
  %s4 = inlined_call_operand.hbm [shape: f32[8,16], index: 4, kind: output, shape index: {}]
  %s5 = sld [smem:[#allocation0]]
  $region26: #{tpu_custom_call.1} parent=0
    _
  %s7 = ssub.s32 1, %s5
  %s8 = scalar_select 0, %s7, %s5
  $region1: #{tpu_custom_call.1} parent=0
    #allocation2 [shape = 'u8[4096]{0}', space=vmem, size = 0x1000, scoped, tag = 'output window, operand 0, single buffered']
    #allocation3 [shape = 's32[1]{0}', space=sflag, size = 0x4, scoped, tag = 'scoped memory for tpu_custom_call.1']
    %9 = vsyncpa [#allocation3], 0
    // Predicated region
    $region2: #{tpu_custom_call.1} parent=1 // pred_check
      _
    $region3: #{tpu_custom_call.1} parent=1 // pred_check_branch
      %11 = sbr.rel (0) target = $region5
    $region4: #{tpu_custom_call.1} parent=1 // pred_region
      _
    $region5: #{tpu_custom_call.1} parent=1 // pred_fallthru
      _
    // Predicated region
    $region6: #{tpu_custom_call.1} parent=1 // pred_check
      _
    $region7: #{tpu_custom_call.1} parent=1 // pred_check_branch
      %13 = sbr.rel (0) target = $region9
    $region8: #{tpu_custom_call.1} parent=1 // pred_region
      _
    $region9: #{tpu_custom_call.1} parent=1 // pred_fallthru
      _
    // Predicated region
    $region10: #{tpu_custom_call.1} parent=1 // pred_check
      _
    $region11: #{tpu_custom_call.1} parent=1 // pred_check_branch
      %15 = sbr.rel (0) target = $region13
    $region12: #{tpu_custom_call.1} parent=1 // pred_region
      _
    $region13: #{tpu_custom_call.1} parent=1 // pred_fallthru
      _
    // Predicated region
    $region14: #{tpu_custom_call.1} parent=1 // pred_check
      _
    $region15: #{tpu_custom_call.1} parent=1 // pred_check_branch
      %17 = sbr.rel (0) target = $region17
    $region16: #{tpu_custom_call.1} parent=1 // pred_region
      _
    $region17: #{tpu_custom_call.1} parent=1 // pred_fallthru
      _
    %v18 = vld [vmem:[%s0] sm:$0xff]
    %v19 = vld [vmem:[%s1] sm:$0xff]
    %v20 = vld [vmem:[%s1 + $0x8] sm:$0xff]
    %vm21 = vcmask 130048
    %v23 = vsel %vm21, %v18, 0
    %25 = vmatpush.msra.mxu0 0.0
    %26 = vmatpush.msra.mxu0 0.0
    %27 = vmatpush.msra.mxu0 0.0
    %28 = vmatpush.msra.mxu0 0.0
    %29 = vmatpush.msra.mxu0 0.0
    %30 = vmatpush.msra.mxu0 0.0
    %31 = vmatpush.msra.mxu0 0.0
    %32 = vmatpush.msra.mxu0 0.0
    %33 = vmatpush.msra.mxu0 0.0
    %34 = vmatpush.msra.mxu0 0.0
    %35 = vmatpush.msra.mxu0 0.0
    %36 = vmatpush.msra.mxu0 0.0
    %37 = vmatpush.msra.mxu0 0.0
    %38 = vmatpush.msra.mxu0 0.0
    %39 = vmatpush.msra.mxu0 %v20
    %40 = vmatpush.msra.mxu0 %v19
    %41 = vmatmul.f32.gmra.mxu0 %v23
    %v42 = vpop.f32.mrf.mxu0
    %v43 = vadd.f32 0.0, %v42
    %44 = vdwg.mxu0
    %v45 = vtanh.pop %v43
    %v46 = vld [vmem:[%s2] sm:$0xff]
    %v47 = vld [vmem:[%s2 + $0x8] sm:$0xff]
    %v48 = vld [vmem:[%s2 + $0x10] sm:$0xff]
    %v49 = vld [vmem:[%s2 + $0x18] sm:$0xff]
    %v50 = vld [vmem:[%s3] sm:$0x1]
    %v52 = vperm.slane %v50, 0
    %vm54 = vcmask 261120
    %v56 = vsel %vm54, %v45, 0
    %58 = vmatpush.msra.mxu0 0.0
    %59 = vmatpush.msra.mxu0 0.0
    %60 = vmatpush.msra.mxu0 0.0
    %61 = vmatpush.msra.mxu0 0.0
    %62 = vmatpush.msra.mxu0 0.0
    %63 = vmatpush.msra.mxu0 0.0
    %64 = vmatpush.msra.mxu0 0.0
    %65 = vmatpush.msra.mxu0 0.0
    %66 = vmatpush.msra.mxu0 0.0
    %67 = vmatpush.msra.mxu0 0.0
    %68 = vmatpush.msra.mxu0 0.0
    %69 = vmatpush.msra.mxu0 0.0
    %70 = vmatpush.msra.mxu0 %v49
    %71 = vmatpush.msra.mxu0 %v48
    %72 = vmatpush.msra.mxu0 %v47
    %73 = vmatpush.msra.mxu0 %v46
    %74 = vmatmul.f32.gmra.mxu0 %v56
    %v75 = vpop.f32.mrf.mxu0
    %v76 = vadd.f32 %v52, %v75
    %77 = vdwg.mxu0
    %78 = vst.msk [vmem:[#allocation2] sm:$0xff] %vm21, %v76
    // Predicated region
    $region18: #{tpu_custom_call.1} parent=1 // pred_check
      _
    $region19: #{tpu_custom_call.1} parent=1 // pred_check_branch
      %80 = sbr.rel (0) target = $region21
    $region20: #{tpu_custom_call.1} parent=1 // pred_region
      %82 = vsyncadd [#allocation3], 0
      %s84 = sshll.u32 [#allocation2], 4
      %s85 = int_to_ptr.vmem [resolvable:$true] %s84
      %s86 = sshll.u32 %s4, 4
      %s87 = int_to_ptr.hbm [resolvable:$true] %s86
      %89 = dma.vmem_to_hbm [thread:$0]  %s85, 128, %s87, [#allocation3]
    $region21: #{tpu_custom_call.1} parent=1 // pred_fallthru
      _
    // Predicated region
    $region22: #{tpu_custom_call.1} parent=1 // pred_check
      _
    $region23: #{tpu_custom_call.1} parent=1 // pred_check_branch
      %91 = sbr.rel (0) target = $region25
    $region24: #{tpu_custom_call.1} parent=1 // pred_region
      %93 = dma.done [#allocation3], 128
    $region25: #{tpu_custom_call.1} parent=1 // pred_fallthru
      _
    %94 = vsyncpa [#allocation3], 1

</llo_original>
